<compile_context>
chip_gen: v6e
topology: v6e:2x2x1
jax: 0.10.0
libtpu: 0.0.40
codegen_flags: <defaults>
</compile_context>

<pallas_src>
import functools

import jax
import jax.numpy as jnp
from jax import lax
from jax.experimental import pallas as pl
from jax.experimental.pallas import tpu as pltpu


def _mlp_kernel(num_linear, compute_dtype, x_ref, *refs):
    """Fused MLP forward for one batch tile.

    refs = (w0, b0, w1, b1, ..., w_{L-1}, b_{L-1}, out_ref)
      x_ref : (tile_n, input_dim)   caller dtype (f32) -- cast in-kernel
      w_i   : (d_out, d_in)         compute_dtype (PyTorch Linear layout)
      b_i   : (d_out, 1)            f32
      out   : (tile_n, output_dim)  natural layout (contiguous HBM rows)
    """
    out_ref = refs[-1]
    params = refs[:-1]
    assert len(params) == 2 * num_linear

    x = x_ref[...].astype(compute_dtype)                    # (tile_n, d_in)

    # Layer 0: contract on d_in (rhs-transposed MXU feed).  Result lands in the
    # lane-dense (width, tile_n) layout: batch on the 128-lane axis, so all
    # hidden-layer VPU work (bias add / ReLU) runs on fully packed vregs.
    w0, b0 = params[0][...], params[1][...]
    h = lax.dot_general(w0, x, (((1,), (1,)), ((), ())),
                        preferred_element_type=jnp.float32) + b0

    # Hidden layers + final layer: plain W @ h on the MXU with f32 accumulate.
    for li in range(1, num_linear):
        h = jnp.maximum(h, 0.0).astype(compute_dtype)        # ReLU between Linears
        w, b = params[2 * li][...], params[2 * li + 1][...]
        h = lax.dot_general(w, h, (((1,), (0,)), ((), ())),
                            preferred_element_type=jnp.float32) + b

    # Sigmoid via EUP: exp + approximate reciprocal (free slot).
    y = pl.reciprocal(1.0 + jnp.exp(-h), approx=True)        # (output_dim, tile_n)

    # Tiny in-kernel transpose (output_dim rows) back to natural layout; this
    # replaces a whole-array HBM transpose pass in the wrapper.
    out_ref[...] = jnp.transpose(y).astype(out_ref.dtype)    # (tile_n, output_dim)


def init_mlp_params(key, input_dim, output_dim, width, num_layers,
                    dtype=jnp.float32):
    """PyTorch-style nn.Linear params: weight (out_features, in_features),
    bias (out_features,). Returns a list of (w, b) tuples, one per Linear."""
    dims = [input_dim] + [width] * num_layers + [output_dim]
    params = []
    for d_in, d_out in zip(dims[:-1], dims[1:]):
        key, kw, kb = jax.random.split(key, 3)
        bound = 1.0 / (d_in ** 0.5)           # PyTorch default Linear init
        w = jax.random.uniform(kw, (d_out, d_in), dtype, -bound, bound)
        b = jax.random.uniform(kb, (d_out,), dtype, -bound, bound)
        params.append((w, b))
    return params


def mlp_reference(x, params):
    """Pure-JAX f32 reference matching the PyTorch module."""
    h = x.astype(jnp.float32)
    for i, (w, b) in enumerate(params):
        h = h @ w.T.astype(jnp.float32) + b.astype(jnp.float32)
        if i < len(params) - 1:
            h = jnp.maximum(h, 0.0)
    return jax.nn.sigmoid(h)


_TILE_CANDIDATES = (16384, 8192, 4096, 2048, 1024, 512, 256, 128)


def _pick_tile(n, max_tile):
    """Largest lane-dense (multiple-of-128) batch tile that fits the VMEM
    budget, preferring >= 4 grid steps (>= 2 per v7x TensorCore), then >= 2,
    then any divisor; single full-batch step as last resort."""
    cands = [t for t in _TILE_CANDIDATES if t <= max_tile]
    for min_steps in (4, 2):
        for t in cands:
            if n % t == 0 and n // t >= min_steps:
                return t
    for t in cands:
        if n % t == 0:
            return t
    return n


def _vmem_cap_bytes():
    """~80% of per-TensorCore VMEM: ~102 MiB on v5e/v6e, ~51 MiB on v7x.
    Fallback (no hw info available at trace time) is v7x-safe."""
    try:
        return int(0.8 * pltpu.get_tpu_info().vmem_capacity_bytes)
    except Exception:
        return 48 << 20


def mlp_forward(x, params, *, tile_n=None, out_dtype=None,
                compute_dtype=jnp.bfloat16, pipelined_params=True):
    """x: (N, input_dim). Returns sigmoid(MLP(x)) of shape (N, output_dim).

    Note: with the default compute_dtype=bf16 weights/activations are truncated
    to bf16 (errors vs the f32 reference at the ~1e-2 level); pass
    compute_dtype=jnp.float32 for bit-closer results -- the MXU is not the
    bottleneck at instant-NGP widths.
    """
    n_orig, input_dim = x.shape
    num_linear = len(params)
    output_dim = params[-1][0].shape[0]
    out_dtype = x.dtype if out_dtype is None else jnp.dtype(out_dtype)
    out_itemsize = jnp.dtype(out_dtype).itemsize

    # Ragged batches: pad to a multiple of 128 lanes, slice the result back.
    n = n_orig
    if n % 128 != 0:
        pad = (-n) % 128
        x = jnp.pad(x, ((0, pad), (0, 0)))
        n += pad

    # Flatten params: weights keep the PyTorch (d_out, d_in) layout in the
    # compute dtype; biases are f32 columns (d_out, 1). These are tiny.
    flat = []
    for (w, b) in params:
        flat.append(w.astype(compute_dtype))
        flat.append(b.reshape(-1, 1).astype(jnp.float32))

    widths = [w.shape[0] for (w, _) in params]
    max_width = max([input_dim] + widths)
    params_bytes = sum(p.size * p.dtype.itemsize for p in flat)

    # ---- VMEM budget (includes live hidden activations; v7x-safe cap) ----
    vmem_cap = _vmem_cap_bytes()
    headroom = 16 << 20                       # Mosaic internal scratch etc.
    acc_bytes = 4 + jnp.dtype(compute_dtype).itemsize
    per_sample = (3 * input_dim * x.dtype.itemsize        # Buffered(3) input tile
                  + 2 * output_dim * out_itemsize         # double-buffered output
                  + 2 * max_width * acc_bytes)            # ~2 live activations
    resident = params_bytes * (1 if pipelined_params else 2)
    avail = max(vmem_cap - resident - headroom, 4 << 20)
    max_tile = max((avail // per_sample) // 128 * 128, 128)

    if tile_n is None:
        tile_n = _pick_tile(n, max_tile)
    assert n % tile_n == 0, "tile_n must divide the (padded) batch size"

    # Request only what this tiling actually needs (never the raw physical cap).
    vmem_limit = int(min(vmem_cap,
                         max(resident + tile_n * per_sample + headroom,
                             32 << 20)))

    # ---- Block specs ------------------------------------------------------
    if pipelined_params:
        x_spec = pl.BlockSpec((tile_n, input_dim), lambda i: (i, 0),
                              pipeline_mode=pl.Buffered(3))

        def param_spec(shape):
            # Constant index_map => block never changes across the grid;
            # single-buffer to halve resident weight VMEM.
            return pl.BlockSpec(shape, lambda i: (0, 0),
                                pipeline_mode=pl.Buffered(1))
    else:
        x_spec = pl.BlockSpec((tile_n, input_dim), lambda i: (i, 0))

        def param_spec(shape):
            return pl.BlockSpec(shape, lambda i: (0, 0))

    out_spec = pl.BlockSpec((tile_n, output_dim), lambda i: (i, 0))
    param_specs = [param_spec(p.shape) for p in flat]

    # Advisory cost estimate for XLA's scheduler.
    dims = [input_dim] + widths
    flops = 2 * n * sum(dims[i] * dims[i + 1] for i in range(len(dims) - 1))
    bytes_accessed = (x.size * x.dtype.itemsize
                      + n * output_dim * out_itemsize
                      + params_bytes)
    cost = pl.CostEstimate(flops=flops,
                           transcendentals=2 * n * output_dim,   # exp + rcp
                           bytes_accessed=bytes_accessed)

    out = pl.pallas_call(
        functools.partial(_mlp_kernel, num_linear, compute_dtype),
        out_shape=jax.ShapeDtypeStruct((n, output_dim), out_dtype),
        grid_spec=pltpu.PrefetchScalarGridSpec(
            num_scalar_prefetch=0,
            grid=(n // tile_n,),
            in_specs=[x_spec] + param_specs,
            out_specs=out_spec,
        ),
        compiler_params=pltpu.CompilerParams(
            # TODO(synk): consider pltpu.CORE_PARALLEL on this axis for explicit
            # 2-TC sharding on v7x once verified on the target JAX build.
            dimension_semantics=("parallel",),
            vmem_limit_bytes=vmem_limit),
        cost_estimate=cost,
    )(x, *flat)

    return out if n == n_orig else out[:n_orig]


if __name__ == "__main__":
    # Shapes consistent with the module: MLP(input_dim=4, output_dim=4,
    # width=32, num_layers=3).  Batch chosen so the lane-dense tiling and the
    # multi-step "parallel" grid are exercised (tile_n=256, grid=(4,)).
    input_dim, output_dim, width, num_layers = 4, 4, 32, 3
    batch = 1024

    key = jax.random.PRNGKey(0)
    key, kx = jax.random.split(key)
    x = jax.random.normal(kx, (batch, input_dim), jnp.float32)
    params = init_mlp_params(key, input_dim, output_dim, width, num_layers)

    try:
        out = jax.block_until_ready(mlp_forward(x, params))
    except Exception:
        # Fallback if this JAX build rejects pipeline_mode=pl.Buffered(k).
        out = jax.block_until_ready(
            mlp_forward(x, params, pipelined_params=False))

    assert out.shape == (batch, output_dim)
    assert bool(jnp.all((out >= 0.0) & (out <= 1.0)))  # sigmoid range sanity

    ref = mlp_reference(x, params)
    max_err = float(jnp.max(jnp.abs(out.astype(jnp.float32) - ref)))
    assert max_err < 2e-2, f"max abs error vs f32 reference: {max_err}"

    print("KERNEL_OK")
</pallas_src>

<mosaic_0001>
module attributes {stable_mosaic.version = 11 : i64} {
  func.func @_mlp_kernel(%arg0: i32, %arg1: memref<256x4xf32, #tpu.memory_space<vmem>>, %arg2: memref<32x4xbf16, #tpu.memory_space<vmem>>, %arg3: memref<32x1xf32, #tpu.memory_space<vmem>>, %arg4: memref<32x32xbf16, #tpu.memory_space<vmem>>, %arg5: memref<32x1xf32, #tpu.memory_space<vmem>>, %arg6: memref<32x32xbf16, #tpu.memory_space<vmem>>, %arg7: memref<32x1xf32, #tpu.memory_space<vmem>>, %arg8: memref<4x32xbf16, #tpu.memory_space<vmem>>, %arg9: memref<4x1xf32, #tpu.memory_space<vmem>>, %arg10: memref<256x4xf32, #tpu.memory_space<vmem>>) attributes {dimension_semantics = [#tpu.dimension_semantics<parallel>], iteration_bounds = array<i64: 4>, scalar_prefetch = 0 : i64, scratch_operands = 0 : i64, tpu.core_type = #tpu.core_type<tc>, window_params = [{transform_indices = @transform_0, window_bounds = array<i64: 256, 4>}, {pipeline_mode = #tpu.pipeline_mode<synchronous>, transform_indices = @transform_1, window_bounds = array<i64: 32, 4>}, {pipeline_mode = #tpu.pipeline_mode<synchronous>, transform_indices = @transform_2, window_bounds = array<i64: 32, 1>}, {pipeline_mode = #tpu.pipeline_mode<synchronous>, transform_indices = @transform_3, window_bounds = array<i64: 32, 32>}, {pipeline_mode = #tpu.pipeline_mode<synchronous>, transform_indices = @transform_4, window_bounds = array<i64: 32, 1>}, {pipeline_mode = #tpu.pipeline_mode<synchronous>, transform_indices = @transform_5, window_bounds = array<i64: 32, 32>}, {pipeline_mode = #tpu.pipeline_mode<synchronous>, transform_indices = @transform_6, window_bounds = array<i64: 32, 1>}, {pipeline_mode = #tpu.pipeline_mode<synchronous>, transform_indices = @transform_7, window_bounds = array<i64: 4, 32>}, {pipeline_mode = #tpu.pipeline_mode<synchronous>, transform_indices = @transform_8, window_bounds = array<i64: 4, 1>}, {transform_indices = @transform_9, window_bounds = array<i64: 256, 4>}]} {
    %c0 = arith.constant 0 : index
    %c0_0 = arith.constant 0 : index
    %0 = vector.load %arg1[%c0, %c0_0] : memref<256x4xf32, #tpu.memory_space<vmem>>, vector<256x4xf32>
    %1 = arith.truncf %0 : vector<256x4xf32> to vector<256x4xbf16>
    %c0_1 = arith.constant 0 : index
    %c0_2 = arith.constant 0 : index
    %2 = vector.load %arg2[%c0_1, %c0_2] : memref<32x4xbf16, #tpu.memory_space<vmem>>, vector<32x4xbf16>
    %c0_3 = arith.constant 0 : index
    %c0_4 = arith.constant 0 : index
    %3 = vector.load %arg3[%c0_3, %c0_4] : memref<32x1xf32, #tpu.memory_space<vmem>>, vector<32x1xf32>
    %cst = arith.constant dense<0.000000e+00> : vector<32x256xf32>
    %4 = tpu.matmul %2, %1, %cst {dimension_numbers = #tpu.dot_dimension_numbers<[1], [1], [0], [0], [0, 0, 1, 0], [], []>} : vector<32x4xbf16>, vector<256x4xbf16>, vector<32x256xf32> -> vector<32x256xf32>
    %5 = vector.broadcast %3 : vector<32x1xf32> to vector<32x256xf32>
    %6 = arith.addf %4, %5 : vector<32x256xf32>
    %cst_5 = arith.constant 0.000000e+00 : f32
    %7 = vector.broadcast %cst_5 : f32 to vector<32x256xf32>
    %8 = arith.maximumf %6, %7 : vector<32x256xf32>
    %9 = arith.truncf %8 : vector<32x256xf32> to vector<32x256xbf16>
    %c0_6 = arith.constant 0 : index
    %c0_7 = arith.constant 0 : index
    %10 = vector.load %arg4[%c0_6, %c0_7] : memref<32x32xbf16, #tpu.memory_space<vmem>>, vector<32x32xbf16>
    %c0_8 = arith.constant 0 : index
    %c0_9 = arith.constant 0 : index
    %11 = vector.load %arg5[%c0_8, %c0_9] : memref<32x1xf32, #tpu.memory_space<vmem>>, vector<32x1xf32>
    %cst_10 = arith.constant dense<0.000000e+00> : vector<32x256xf32>
    %12 = tpu.matmul %10, %9, %cst_10 {dimension_numbers = #tpu.dot_dimension_numbers<[1], [0], [0], [1], [0, 0, 1, 1], [], []>} : vector<32x32xbf16>, vector<32x256xbf16>, vector<32x256xf32> -> vector<32x256xf32>
    %13 = vector.broadcast %11 : vector<32x1xf32> to vector<32x256xf32>
    %14 = arith.addf %12, %13 : vector<32x256xf32>
    %cst_11 = arith.constant 0.000000e+00 : f32
    %15 = vector.broadcast %cst_11 : f32 to vector<32x256xf32>
    %16 = arith.maximumf %14, %15 : vector<32x256xf32>
    %17 = arith.truncf %16 : vector<32x256xf32> to vector<32x256xbf16>
    %c0_12 = arith.constant 0 : index
    %c0_13 = arith.constant 0 : index
    %18 = vector.load %arg6[%c0_12, %c0_13] : memref<32x32xbf16, #tpu.memory_space<vmem>>, vector<32x32xbf16>
    %c0_14 = arith.constant 0 : index
    %c0_15 = arith.constant 0 : index
    %19 = vector.load %arg7[%c0_14, %c0_15] : memref<32x1xf32, #tpu.memory_space<vmem>>, vector<32x1xf32>
    %cst_16 = arith.constant dense<0.000000e+00> : vector<32x256xf32>
    %20 = tpu.matmul %18, %17, %cst_16 {dimension_numbers = #tpu.dot_dimension_numbers<[1], [0], [0], [1], [0, 0, 1, 1], [], []>} : vector<32x32xbf16>, vector<32x256xbf16>, vector<32x256xf32> -> vector<32x256xf32>
    %21 = vector.broadcast %19 : vector<32x1xf32> to vector<32x256xf32>
    %22 = arith.addf %20, %21 : vector<32x256xf32>
    %cst_17 = arith.constant 0.000000e+00 : f32
    %23 = vector.broadcast %cst_17 : f32 to vector<32x256xf32>
    %24 = arith.maximumf %22, %23 : vector<32x256xf32>
    %25 = arith.truncf %24 : vector<32x256xf32> to vector<32x256xbf16>
    %c0_18 = arith.constant 0 : index
    %c0_19 = arith.constant 0 : index
    %26 = vector.load %arg8[%c0_18, %c0_19] : memref<4x32xbf16, #tpu.memory_space<vmem>>, vector<4x32xbf16>
    %c0_20 = arith.constant 0 : index
    %c0_21 = arith.constant 0 : index
    %27 = vector.load %arg9[%c0_20, %c0_21] : memref<4x1xf32, #tpu.memory_space<vmem>>, vector<4x1xf32>
    %cst_22 = arith.constant dense<0.000000e+00> : vector<4x256xf32>
    %28 = tpu.matmul %26, %25, %cst_22 {dimension_numbers = #tpu.dot_dimension_numbers<[1], [0], [0], [1], [0, 0, 1, 1], [], []>} : vector<4x32xbf16>, vector<32x256xbf16>, vector<4x256xf32> -> vector<4x256xf32>
    %29 = vector.broadcast %27 : vector<4x1xf32> to vector<4x256xf32>
    %30 = arith.addf %28, %29 : vector<4x256xf32>
    %cst_23 = arith.constant 0.000000e+00 : f32
    %31 = vector.broadcast %cst_23 : f32 to vector<4x256xf32>
    %32 = arith.subf %31, %30 : vector<4x256xf32>
    %33 = math.exp %32 : vector<4x256xf32>
    %cst_24 = arith.constant 1.000000e+00 : f32
    %34 = vector.broadcast %cst_24 : f32 to vector<4x256xf32>
    %35 = arith.addf %34, %33 : vector<4x256xf32>
    %36 = tpu.reciprocal %35 {approx = true} : vector<4x256xf32> -> vector<4x256xf32>
    %37 = tpu.transpose %36, [1, 0] : vector<4x256xf32> -> vector<256x4xf32>
    %c0_25 = arith.constant 0 : index
    %c0_26 = arith.constant 0 : index
    %38 = vector.load %arg10[%c0_25, %c0_26] : memref<256x4xf32, #tpu.memory_space<vmem>>, vector<256x4xf32>
    tpu.vector_store %arg10[%c0_25, %c0_26], %37 {strides = array<i32>} : memref<256x4xf32, #tpu.memory_space<vmem>>, vector<256x4xf32>,
    return
  }
  func.func @transform_0(%arg0: i32) -> (i32, i32) {
    %c0_i32 = arith.constant 0 : i32
    %c0_i32_0 = arith.constant 0 : i32
    return %arg0, %c0_i32 : i32, i32
  }
  func.func @transform_1(%arg0: i32) -> (i32, i32) {
    %c0_i32 = arith.constant 0 : i32
    %c0_i32_0 = arith.constant 0 : i32
    %c0_i32_1 = arith.constant 0 : i32
    return %c0_i32, %c0_i32_0 : i32, i32
  }
  func.func @transform_2(%arg0: i32) -> (i32, i32) {
    %c0_i32 = arith.constant 0 : i32
    %c0_i32_0 = arith.constant 0 : i32
    %c0_i32_1 = arith.constant 0 : i32
    return %c0_i32, %c0_i32_0 : i32, i32
  }
  func.func @transform_3(%arg0: i32) -> (i32, i32) {
    %c0_i32 = arith.constant 0 : i32
    %c0_i32_0 = arith.constant 0 : i32
    %c0_i32_1 = arith.constant 0 : i32
    return %c0_i32, %c0_i32_0 : i32, i32
  }
  func.func @transform_4(%arg0: i32) -> (i32, i32) {
    %c0_i32 = arith.constant 0 : i32
    %c0_i32_0 = arith.constant 0 : i32
    %c0_i32_1 = arith.constant 0 : i32
    return %c0_i32, %c0_i32_0 : i32, i32
  }
  func.func @transform_5(%arg0: i32) -> (i32, i32) {
    %c0_i32 = arith.constant 0 : i32
    %c0_i32_0 = arith.constant 0 : i32
    %c0_i32_1 = arith.constant 0 : i32
    return %c0_i32, %c0_i32_0 : i32, i32
  }
  func.func @transform_6(%arg0: i32) -> (i32, i32) {
    %c0_i32 = arith.constant 0 : i32
    %c0_i32_0 = arith.constant 0 : i32
    %c0_i32_1 = arith.constant 0 : i32
    return %c0_i32, %c0_i32_0 : i32, i32
  }
  func.func @transform_7(%arg0: i32) -> (i32, i32) {
    %c0_i32 = arith.constant 0 : i32
    %c0_i32_0 = arith.constant 0 : i32
    %c0_i32_1 = arith.constant 0 : i32
    return %c0_i32, %c0_i32_0 : i32, i32
  }
  func.func @transform_8(%arg0: i32) -> (i32, i32) {
    %c0_i32 = arith.constant 0 : i32
    %c0_i32_0 = arith.constant 0 : i32
    %c0_i32_1 = arith.constant 0 : i32
    return %c0_i32, %c0_i32_0 : i32, i32
  }
  func.func @transform_9(%arg0: i32) -> (i32, i32) {
    %c0_i32 = arith.constant 0 : i32
    %c0_i32_0 = arith.constant 0 : i32
    return %arg0, %c0_i32 : i32, i32
  }
}

</mosaic_0001>

<llo_original>
// kernel: tpu_custom_call.1
$region0: #{tpu_custom_call.1}
  #allocation0 [shape = 'u32[]', space=smem, size = 0x4, offset = 0x4, fixed_abs, tag = 'smem constant byte address 0x4 - core index']
  #allocation1 [shape = 'u32[144,128]{1,0:T(1,128)}', space=vmem, size = 0x12000, scoped, tag = 'internal scratch']
  %s0 = inlined_call_operand.vmem [shape: f32[1024,4], index: 0, kind: input, shape index: {}]
  %s1 = inlined_call_operand.vmem [shape: bf16[32,4], index: 1, kind: input, shape index: {}]
  %s2 = inlined_call_operand.vmem [shape: f32[32,1], index: 2, kind: input, shape index: {}]
  %s3 = inlined_call_operand.vmem [shape: bf16[32,32], index: 3, kind: input, shape index: {}]
  %s4 = inlined_call_operand.vmem [shape: f32[32,1], index: 4, kind: input, shape index: {}]
  %s5 = inlined_call_operand.vmem [shape: bf16[32,32], index: 5, kind: input, shape index: {}]
  %s6 = inlined_call_operand.vmem [shape: f32[32,1], index: 6, kind: input, shape index: {}]
  %s7 = inlined_call_operand.vmem [shape: bf16[4,32], index: 7, kind: input, shape index: {}]
  %s8 = inlined_call_operand.vmem [shape: f32[4,1], index: 8, kind: input, shape index: {}]
  %s9 = inlined_call_operand.vmem [shape: f32[1024,4], index: 9, kind: output, shape index: {}]
  %s10 = sld [smem:[#allocation0]]
  $region69: #{tpu_custom_call.1} parent=0
    _
  %s12 = ssub.s32 1, %s10
  %s13 = scalar_select 0, %s12, %s10
  loop: start=0, step=1, limit=6
  $region2: #{tpu_custom_call.1} parent=0 // loop_pre_header
    _
  $region3: #{tpu_custom_call.1} parent=0 // loop_header
    %s15 = sphi 0, %s19
    %p16 = scmp.ge.s32.totalorder %s15, 6
    %s25 = sphi 0, %s27
    %s28 = sphi 0, %s25
    %s29 = sphi 0, %s28
    %s45 = sphi 0, %s29
    %s49 = sphi 0, %s49
    %s51 = sphi 0, %s49
    %s52 = sphi 0, %s51
    %s66 = sphi 0, %s52
    %s70 = sphi 0, %s70
    %s72 = sphi 0, %s70
    %s73 = sphi 0, %s72
    %s87 = sphi 0, %s73
    %s91 = sphi 0, %s91
    %s93 = sphi 0, %s91
    %s94 = sphi 0, %s93
    %s108 = sphi 0, %s94
    %s112 = sphi 0, %s112
    %s114 = sphi 0, %s112
    %s115 = sphi 0, %s114
    %s129 = sphi 0, %s115
    %s133 = sphi 0, %s133
    %s135 = sphi 0, %s133
    %s136 = sphi 0, %s135
    %s150 = sphi 0, %s136
    %s154 = sphi 0, %s154
    %s156 = sphi 0, %s154
    %s157 = sphi 0, %s156
    %s171 = sphi 0, %s157
    %s175 = sphi 0, %s175
    %s177 = sphi 0, %s175
    %s178 = sphi 0, %s177
    %s192 = sphi 0, %s178
    %s196 = sphi 0, %s196
    %s198 = sphi 0, %s196
    %s199 = sphi 0, %s198
    %s213 = sphi 0, %s199
    %s219 = sphi 0, %s221
    %s222 = sphi 0, %s219
    %s223 = sphi 0, %s222
    %s239 = sphi 0, %s223
  $region4: #{tpu_custom_call.1} parent=0 // loop_header_branch
    %18 = sbr.rel (%p16) target = $region8
  $region5: #{tpu_custom_call.1} parent=0 // loop_body
    %s20 = ssub.s32 %s15, 1
    %s21 = ssub.s32 %s15, 2
    %s22 = sadd.s32 %s15, 1
    %s23 = ssub.s32 %s15, %s22
    %p24 = scmp.eq.s32.totalorder %s23, 0
    %s26 = sadd.s32 %s25, 1
    %s27 = scalar_select %p24, %s25, %s26
    %p30 = pneg %p24
    %p31 = scmp.eq.s32.totalorder %s15, 3
    %p32 = por %p30, %p31
    %p33 = scmp.ne.s32.totalorder %s25, %s28
    %p34 = scmp.eq.s32.totalorder %s15, 0
    %p35 = por %p33, %p34
    %p36 = scmp.ne.s32.totalorder %s25, %s28
    %p37 = scmp.eq.s32.totalorder %s20, 3
    %p38 = por %p36, %p37
    %p39 = scmp.ne.s32.totalorder %s28, %s29
    %p40 = scmp.eq.s32.totalorder %s20, 0
    %p41 = por %p39, %p40
    %p42 = scmp.ne.s32.totalorder %s28, %s29
    %p43 = scmp.eq.s32.totalorder %s21, 3
    %p44 = por %p42, %p43
    %p46 = scmp.ne.s32.totalorder %s29, %s45
    %p47 = scmp.eq.s32.totalorder %s21, 0
    %p48 = por %p46, %p47
    %s50 = sadd.s32 %s49, 1
    %p53 = scmp.eq.s32.totalorder %s15, 3
    %p54 = scmp.ne.s32.totalorder %s49, %s51
    %p55 = scmp.eq.s32.totalorder %s15, 0
    %p56 = por %p54, %p55
    %p57 = scmp.ne.s32.totalorder %s49, %s51
    %p58 = scmp.eq.s32.totalorder %s20, 3
    %p59 = por %p57, %p58
    %p60 = scmp.ne.s32.totalorder %s51, %s52
    %p61 = scmp.eq.s32.totalorder %s20, 0
    %p62 = por %p60, %p61
    %p63 = scmp.ne.s32.totalorder %s51, %s52
    %p64 = scmp.eq.s32.totalorder %s21, 3
    %p65 = por %p63, %p64
    %p67 = scmp.ne.s32.totalorder %s52, %s66
    %p68 = scmp.eq.s32.totalorder %s21, 0
    %p69 = por %p67, %p68
    %s71 = sadd.s32 %s70, 1
    %p74 = scmp.eq.s32.totalorder %s15, 3
    %p75 = scmp.ne.s32.totalorder %s70, %s72
    %p76 = scmp.eq.s32.totalorder %s15, 0
    %p77 = por %p75, %p76
    %p78 = scmp.ne.s32.totalorder %s70, %s72
    %p79 = scmp.eq.s32.totalorder %s20, 3
    %p80 = por %p78, %p79
    %p81 = scmp.ne.s32.totalorder %s72, %s73
    %p82 = scmp.eq.s32.totalorder %s20, 0
    %p83 = por %p81, %p82
    %p84 = scmp.ne.s32.totalorder %s72, %s73
    %p85 = scmp.eq.s32.totalorder %s21, 3
    %p86 = por %p84, %p85
    %p88 = scmp.ne.s32.totalorder %s73, %s87
    %p89 = scmp.eq.s32.totalorder %s21, 0
    %p90 = por %p88, %p89
    %s92 = sadd.s32 %s91, 1
    %p95 = scmp.eq.s32.totalorder %s15, 3
    %p96 = scmp.ne.s32.totalorder %s91, %s93
    %p97 = scmp.eq.s32.totalorder %s15, 0
    %p98 = por %p96, %p97
    %p99 = scmp.ne.s32.totalorder %s91, %s93
    %p100 = scmp.eq.s32.totalorder %s20, 3
    %p101 = por %p99, %p100
    %p102 = scmp.ne.s32.totalorder %s93, %s94
    %p103 = scmp.eq.s32.totalorder %s20, 0
    %p104 = por %p102, %p103
    %p105 = scmp.ne.s32.totalorder %s93, %s94
    %p106 = scmp.eq.s32.totalorder %s21, 3
    %p107 = por %p105, %p106
    %p109 = scmp.ne.s32.totalorder %s94, %s108
    %p110 = scmp.eq.s32.totalorder %s21, 0
    %p111 = por %p109, %p110
    %s113 = sadd.s32 %s112, 1
    %p116 = scmp.eq.s32.totalorder %s15, 3
    %p117 = scmp.ne.s32.totalorder %s112, %s114
    %p118 = scmp.eq.s32.totalorder %s15, 0
    %p119 = por %p117, %p118
    %p120 = scmp.ne.s32.totalorder %s112, %s114
    %p121 = scmp.eq.s32.totalorder %s20, 3
    %p122 = por %p120, %p121
    %p123 = scmp.ne.s32.totalorder %s114, %s115
    %p124 = scmp.eq.s32.totalorder %s20, 0
    %p125 = por %p123, %p124
    %p126 = scmp.ne.s32.totalorder %s114, %s115
    %p127 = scmp.eq.s32.totalorder %s21, 3
    %p128 = por %p126, %p127
    %p130 = scmp.ne.s32.totalorder %s115, %s129
    %p131 = scmp.eq.s32.totalorder %s21, 0
    %p132 = por %p130, %p131
    %s134 = sadd.s32 %s133, 1
    %p137 = scmp.eq.s32.totalorder %s15, 3
    %p138 = scmp.ne.s32.totalorder %s133, %s135
    %p139 = scmp.eq.s32.totalorder %s15, 0
    %p140 = por %p138, %p139
    %p141 = scmp.ne.s32.totalorder %s133, %s135
    %p142 = scmp.eq.s32.totalorder %s20, 3
    %p143 = por %p141, %p142
    %p144 = scmp.ne.s32.totalorder %s135, %s136
    %p145 = scmp.eq.s32.totalorder %s20, 0
    %p146 = por %p144, %p145
    %p147 = scmp.ne.s32.totalorder %s135, %s136
    %p148 = scmp.eq.s32.totalorder %s21, 3
    %p149 = por %p147, %p148
    %p151 = scmp.ne.s32.totalorder %s136, %s150
    %p152 = scmp.eq.s32.totalorder %s21, 0
    %p153 = por %p151, %p152
    %s155 = sadd.s32 %s154, 1
    %p158 = scmp.eq.s32.totalorder %s15, 3
    %p159 = scmp.ne.s32.totalorder %s154, %s156
    %p160 = scmp.eq.s32.totalorder %s15, 0
    %p161 = por %p159, %p160
    %p162 = scmp.ne.s32.totalorder %s154, %s156
    %p163 = scmp.eq.s32.totalorder %s20, 3
    %p164 = por %p162, %p163
    %p165 = scmp.ne.s32.totalorder %s156, %s157
    %p166 = scmp.eq.s32.totalorder %s20, 0
    %p167 = por %p165, %p166
    %p168 = scmp.ne.s32.totalorder %s156, %s157
    %p169 = scmp.eq.s32.totalorder %s21, 3
    %p170 = por %p168, %p169
    %p172 = scmp.ne.s32.totalorder %s157, %s171
    %p173 = scmp.eq.s32.totalorder %s21, 0
    %p174 = por %p172, %p173
    %s176 = sadd.s32 %s175, 1
    %p179 = scmp.eq.s32.totalorder %s15, 3
    %p180 = scmp.ne.s32.totalorder %s175, %s177
    %p181 = scmp.eq.s32.totalorder %s15, 0
    %p182 = por %p180, %p181
    %p183 = scmp.ne.s32.totalorder %s175, %s177
    %p184 = scmp.eq.s32.totalorder %s20, 3
    %p185 = por %p183, %p184
    %p186 = scmp.ne.s32.totalorder %s177, %s178
    %p187 = scmp.eq.s32.totalorder %s20, 0
    %p188 = por %p186, %p187
    %p189 = scmp.ne.s32.totalorder %s177, %s178
    %p190 = scmp.eq.s32.totalorder %s21, 3
    %p191 = por %p189, %p190
    %p193 = scmp.ne.s32.totalorder %s178, %s192
    %p194 = scmp.eq.s32.totalorder %s21, 0
    %p195 = por %p193, %p194
    %s197 = sadd.s32 %s196, 1
    %p200 = scmp.eq.s32.totalorder %s15, 3
    %p201 = scmp.ne.s32.totalorder %s196, %s198
    %p202 = scmp.eq.s32.totalorder %s15, 0
    %p203 = por %p201, %p202
    %p204 = scmp.ne.s32.totalorder %s196, %s198
    %p205 = scmp.eq.s32.totalorder %s20, 3
    %p206 = por %p204, %p205
    %p207 = scmp.ne.s32.totalorder %s198, %s199
    %p208 = scmp.eq.s32.totalorder %s20, 0
    %p209 = por %p207, %p208
    %p210 = scmp.ne.s32.totalorder %s198, %s199
    %p211 = scmp.eq.s32.totalorder %s21, 3
    %p212 = por %p210, %p211
    %p214 = scmp.ne.s32.totalorder %s199, %s213
    %p215 = scmp.eq.s32.totalorder %s21, 0
    %p216 = por %p214, %p215
    %s217 = ssub.s32 %s15, %s22
    %p218 = scmp.eq.s32.totalorder %s217, 0
    %s220 = sadd.s32 %s219, 1
    %s221 = scalar_select %p218, %s219, %s220
    %p224 = pneg %p218
    %p225 = scmp.eq.s32.totalorder %s15, 3
    %p226 = por %p224, %p225
    %p227 = scmp.ne.s32.totalorder %s219, %s222
    %p228 = scmp.eq.s32.totalorder %s15, 0
    %p229 = por %p227, %p228
    %p230 = scmp.ne.s32.totalorder %s219, %s222
    %p231 = scmp.eq.s32.totalorder %s20, 3
    %p232 = por %p230, %p231
    %p233 = scmp.ne.s32.totalorder %s222, %s223
    %p234 = scmp.eq.s32.totalorder %s20, 0
    %p235 = por %p233, %p234
    %p236 = scmp.ne.s32.totalorder %s222, %s223
    %p237 = scmp.eq.s32.totalorder %s21, 3
    %p238 = por %p236, %p237
    %p240 = scmp.ne.s32.totalorder %s223, %s239
    %p241 = scmp.eq.s32.totalorder %s21, 0
    %p242 = por %p240, %p241
    %p243 = scmp.le.s32.totalorder 1, %s15
    %p244 = scmp.lt.s32.totalorder %s15, 5
    %p245 = pnand %p243, %p244
    %p246 = pneg %p245
    // Predicated region
    $region9: #{tpu_custom_call.1} parent=5 // pred_check
      _
    $region10: #{tpu_custom_call.1} parent=5 // pred_check_branch
      %248 = sbr.rel (%p245) target = $region12
    $region11: #{tpu_custom_call.1} parent=5 // pred_region
      %s249 = ssub.s32 %s15, 1
      // Predicated region
      $region13: #{tpu_custom_call.1} parent=11 // pred_check
        %p250 = pneg %p62
      $region14: #{tpu_custom_call.1} parent=11 // pred_check_branch
        %252 = sbr.rel (%p250) target = $region16
      $region15: #{tpu_custom_call.1} parent=11 // pred_region
        _
      $region16: #{tpu_custom_call.1} parent=11 // pred_fallthru
        _
      // Predicated region
      $region17: #{tpu_custom_call.1} parent=11 // pred_check
        %p253 = pneg %p83
      $region18: #{tpu_custom_call.1} parent=11 // pred_check_branch
        %255 = sbr.rel (%p253) target = $region20
      $region19: #{tpu_custom_call.1} parent=11 // pred_region
        _
      $region20: #{tpu_custom_call.1} parent=11 // pred_fallthru
        _
      // Predicated region
      $region21: #{tpu_custom_call.1} parent=11 // pred_check
        %p256 = pneg %p104
      $region22: #{tpu_custom_call.1} parent=11 // pred_check_branch
        %258 = sbr.rel (%p256) target = $region24
      $region23: #{tpu_custom_call.1} parent=11 // pred_region
        _
      $region24: #{tpu_custom_call.1} parent=11 // pred_fallthru
        _
      // Predicated region
      $region25: #{tpu_custom_call.1} parent=11 // pred_check
        %p259 = pneg %p125
      $region26: #{tpu_custom_call.1} parent=11 // pred_check_branch
        %261 = sbr.rel (%p259) target = $region28
      $region27: #{tpu_custom_call.1} parent=11 // pred_region
        _
      $region28: #{tpu_custom_call.1} parent=11 // pred_fallthru
        _
      // Predicated region
      $region29: #{tpu_custom_call.1} parent=11 // pred_check
        %p262 = pneg %p146
      $region30: #{tpu_custom_call.1} parent=11 // pred_check_branch
        %264 = sbr.rel (%p262) target = $region32
      $region31: #{tpu_custom_call.1} parent=11 // pred_region
        _
      $region32: #{tpu_custom_call.1} parent=11 // pred_fallthru
        _
      // Predicated region
      $region33: #{tpu_custom_call.1} parent=11 // pred_check
        %p265 = pneg %p167
      $region34: #{tpu_custom_call.1} parent=11 // pred_check_branch
        %267 = sbr.rel (%p265) target = $region36
      $region35: #{tpu_custom_call.1} parent=11 // pred_region
        _
      $region36: #{tpu_custom_call.1} parent=11 // pred_fallthru
        _
      // Predicated region
      $region37: #{tpu_custom_call.1} parent=11 // pred_check
        %p268 = pneg %p188
      $region38: #{tpu_custom_call.1} parent=11 // pred_check_branch
        %270 = sbr.rel (%p268) target = $region40
      $region39: #{tpu_custom_call.1} parent=11 // pred_region
        _
      $region40: #{tpu_custom_call.1} parent=11 // pred_fallthru
        _
      // Predicated region
      $region41: #{tpu_custom_call.1} parent=11 // pred_check
        %p271 = pneg %p209
      $region42: #{tpu_custom_call.1} parent=11 // pred_check_branch
        %273 = sbr.rel (%p271) target = $region44
      $region43: #{tpu_custom_call.1} parent=11 // pred_region
        _
      $region44: #{tpu_custom_call.1} parent=11 // pred_fallthru
        _
    $region12: #{tpu_custom_call.1} parent=5 // pred_fallthru
      _
    %p274 = scmp.lt.s32.totalorder %s15, 4
    // Predicated region
    $region45: #{tpu_custom_call.1} parent=5 // pred_check
      %p275 = pneg %p274
    $region46: #{tpu_custom_call.1} parent=5 // pred_check_branch
      %277 = sbr.rel (%p275) target = $region48
    $region47: #{tpu_custom_call.1} parent=5 // pred_region
      // Predicated region
      $region49: #{tpu_custom_call.1} parent=47 // pred_check
        %p278 = pneg %p35
      $region50: #{tpu_custom_call.1} parent=47 // pred_check_branch
        %280 = sbr.rel (%p278) target = $region52
      $region51: #{tpu_custom_call.1} parent=47 // pred_region
        %s281 = smul.u32 32, %s15
        %p282 = scmp.lt.s32.totalorder %s281, 127
        %s283 = scalar_select %p282, %s281, 127
        %s284 = smul.addr %s283, 8
        %s285 = scalar_lea.vmem %s0, %s284
        %s286 = smul.u32 32, %s15
      $region52: #{tpu_custom_call.1} parent=47 // pred_fallthru
        _
    $region48: #{tpu_custom_call.1} parent=5 // pred_fallthru
      _
    %p287 = scmp.le.s32.totalorder 1, %s15
    %p288 = scmp.lt.s32.totalorder %s15, 5
    %p289 = pnand %p287, %p288
    %p290 = pneg %p289
    // Predicated region
    $region53: #{tpu_custom_call.1} parent=5 // pred_check
      _
    $region54: #{tpu_custom_call.1} parent=5 // pred_check_branch
      %292 = sbr.rel (%p289) target = $region56
    $region55: #{tpu_custom_call.1} parent=5 // pred_region
      %s293 = ssub.s32 %s15, 1
      %s294 = smul.u32 32, %s20
      %p295 = scmp.lt.s32.totalorder %s294, 127
      %s296 = scalar_select %p295, %s294, 127
      %s297 = smul.addr %s296, 8
      %s298 = scalar_lea.vmem %s0, %s297
      %p299 = pneg %p41
      %p300 = pneg %p38
      %p301 = pneg %p62
      %p302 = pneg %p59
      %p303 = pneg %p83
      %p304 = pneg %p80
      %p305 = pneg %p104
      %p306 = pneg %p101
      %p307 = pneg %p125
      %p308 = pneg %p122
      %p309 = pneg %p146
      %p310 = pneg %p143
      %p311 = pneg %p167
      %p312 = pneg %p164
      %p313 = pneg %p188
      %p314 = pneg %p185
      %p315 = pneg %p209
      %p316 = pneg %p206
      %p317 = pneg %p235
      %p318 = pneg %p232
      %s319 = smul.u32 32, %s20
      %p320 = scmp.lt.s32.totalorder %s319, 127
      %s321 = scalar_select %p320, %s319, 127
      %s322 = smul.addr %s321, 8
      %s323 = scalar_lea.vmem %s9, %s322
      %s324 = smul.u32 32, %s20
      %p325 = scmp.lt.s32.totalorder %s324, 127
      %s326 = scalar_select %p325, %s324, 127
      %s327 = smul.addr %s326, 8
      %s328 = scalar_lea.vmem %s0, %s327
      %s329 = smul.u32 32, %s20
      %s330 = smul.u32 32, %s20
      %p331 = scmp.lt.s32.totalorder %s330, 127
      %s332 = scalar_select %p331, %s330, 127
      %s333 = smul.addr %s332, 8
      %s334 = scalar_lea.vmem %s9, %s333
      %s335 = smul.u32 32, %s20
      %v337 = vld [vmem:[%s328] sm:$0xff]
      %v338 = vld [vmem:[%s328 + $0x8] sm:$0xff]
      %v339 = vld [vmem:[%s328 + $0x10] sm:$0xff]
      %v340 = vld [vmem:[%s328 + $0x18] sm:$0xff]
      %v341 = vld [vmem:[%s328 + $0x20] sm:$0xff]
      %v342 = vld [vmem:[%s328 + $0x28] sm:$0xff]
      %v343 = vld [vmem:[%s328 + $0x30] sm:$0xff]
      %v344 = vld [vmem:[%s328 + $0x38] sm:$0xff]
      %v345 = vld [vmem:[%s328 + $0x40] sm:$0xff]
      %v346 = vld [vmem:[%s328 + $0x48] sm:$0xff]
      %v347 = vld [vmem:[%s328 + $0x50] sm:$0xff]
      %v348 = vld [vmem:[%s328 + $0x58] sm:$0xff]
      %v349 = vld [vmem:[%s328 + $0x60] sm:$0xff]
      %v350 = vld [vmem:[%s328 + $0x68] sm:$0xff]
      %v351 = vld [vmem:[%s328 + $0x70] sm:$0xff]
      %v352 = vld [vmem:[%s328 + $0x78] sm:$0xff]
      %v353 = vld [vmem:[%s328 + $0x80] sm:$0xff]
      %v354 = vld [vmem:[%s328 + $0x88] sm:$0xff]
      %v355 = vld [vmem:[%s328 + $0x90] sm:$0xff]
      %v356 = vld [vmem:[%s328 + $0x98] sm:$0xff]
      %v357 = vld [vmem:[%s328 + $0xa0] sm:$0xff]
      %v358 = vld [vmem:[%s328 + $0xa8] sm:$0xff]
      %v359 = vld [vmem:[%s328 + $0xb0] sm:$0xff]
      %v360 = vld [vmem:[%s328 + $0xb8] sm:$0xff]
      %v361 = vld [vmem:[%s328 + $0xc0] sm:$0xff]
      %v362 = vld [vmem:[%s328 + $0xc8] sm:$0xff]
      %v363 = vld [vmem:[%s328 + $0xd0] sm:$0xff]
      %v364 = vld [vmem:[%s328 + $0xd8] sm:$0xff]
      %v365 = vld [vmem:[%s328 + $0xe0] sm:$0xff]
      %v366 = vld [vmem:[%s328 + $0xe8] sm:$0xff]
      %v367 = vld [vmem:[%s328 + $0xf0] sm:$0xff]
      %v368 = vld [vmem:[%s328 + $0xf8] sm:$0xff]
      %v369 = vpack.c.bf16 %v338, %v337
      %v370 = vpack.c.bf16 %v340, %v339
      %v371 = vpack.c.bf16 %v342, %v341
      %v372 = vpack.c.bf16 %v344, %v343
      %v373 = vpack.c.bf16 %v346, %v345
      %v374 = vpack.c.bf16 %v348, %v347
      %v375 = vpack.c.bf16 %v350, %v349
      %v376 = vpack.c.bf16 %v352, %v351
      %v377 = vpack.c.bf16 %v354, %v353
      %v378 = vpack.c.bf16 %v356, %v355
      %v379 = vpack.c.bf16 %v358, %v357
      %v380 = vpack.c.bf16 %v360, %v359
      %v381 = vpack.c.bf16 %v362, %v361
      %v382 = vpack.c.bf16 %v364, %v363
      %v383 = vpack.c.bf16 %v366, %v365
      %v384 = vpack.c.bf16 %v368, %v367
      %v385 = vld [vmem:[%s1] sm:$0xf]
      %v386 = vld [vmem:[%s1 + $0x4] sm:$0xf]
      %v387 = vld [vmem:[%s1 + $0x8] sm:$0xf]
      %v388 = vld [vmem:[%s1 + $0xc] sm:$0xf]
      %v389 = vld [vmem:[%s2] sm:$0xff]
      %v390 = vld [vmem:[%s2 + $0x8] sm:$0xff]
      %v391 = vld [vmem:[%s2 + $0x10] sm:$0xff]
      %v392 = vld [vmem:[%s2 + $0x18] sm:$0xff]
      %394 = vset.pattern.permute.xlu0 0
      %395 = vperm.xlu0 %394, %v389
      %v396 = vpop.permute.xlu0 %395
      %399 = vset.pattern.permute.xlu0 0
      %400 = vperm.xlu0 %399, %v390
      %v401 = vpop.permute.xlu0 %400
      %404 = vset.pattern.permute.xlu0 0
      %405 = vperm.xlu0 %404, %v391
      %v406 = vpop.permute.xlu0 %405
      %409 = vset.pattern.permute.xlu0 0
      %410 = vperm.xlu0 %409, %v392
      %v411 = vpop.permute.xlu0 %410
      %v417 = vunpack.c.l.b16 %v385
      %v418 = vunpack.c.l.b16 %v386
      %v419 = vunpack.c.l.b16 %v387
      %v420 = vunpack.c.l.b16 %v388
      %v421 = vpack.c.b16 %v418, %v417
      %v422 = vpack.c.b16 %v420, %v419
      %vm423 = vcmask 31744
      %v425 = vsel %vm423, %v421, 0
      %v428 = vsel %vm423, %v422, 0
      %v431 = vsel %vm423, %v369, 0
      %v434 = vsel %vm423, %v370, 0
      %v437 = vsel %vm423, %v371, 0
      %v440 = vsel %vm423, %v372, 0
      %v443 = vsel %vm423, %v373, 0
      %v446 = vsel %vm423, %v374, 0
      %v449 = vsel %vm423, %v375, 0
      %v452 = vsel %vm423, %v376, 0
      %v455 = vsel %vm423, %v377, 0
      %v458 = vsel %vm423, %v378, 0
      %v461 = vsel %vm423, %v379, 0
      %v464 = vsel %vm423, %v380, 0
      %v467 = vsel %vm423, %v381, 0
      %v470 = vsel %vm423, %v382, 0
      %v473 = vsel %vm423, %v383, 0
      %v476 = vsel %vm423, %v384, 0
      %478 = vmatprep.subr.bf16.mxu0 0
      %479 = vmatpush1.bf16.xpose.msra.mxu0 %v452
      %480 = vmatprep.subr.bf16.mxu0 0
      %481 = vmatpush1.bf16.xpose.msra.mxu0 %v449
      %482 = vmatprep.subr.bf16.mxu0 0
      %483 = vmatpush1.bf16.xpose.msra.mxu0 %v446
      %484 = vmatprep.subr.bf16.mxu0 0
      %485 = vmatpush1.bf16.xpose.msra.mxu0 %v443
      %486 = vmatprep.subr.bf16.mxu0 0
      %487 = vmatpush1.bf16.xpose.msra.mxu0 %v440
      %488 = vmatprep.subr.bf16.mxu0 0
      %489 = vmatpush1.bf16.xpose.msra.mxu0 %v437
      %490 = vmatprep.subr.bf16.mxu0 0
      %491 = vmatpush1.bf16.xpose.msra.mxu0 %v434
      %492 = vmatprep.subr.bf16.mxu0 0
      %493 = vmatpush1.bf16.xpose.msra.mxu0 %v431
      %494 = vmatprep.subr.bf16.mxu0 0
      %495 = vmatpush2.bf16.xpose.msra.mxu0 %v476
      %496 = vmatprep.subr.bf16.mxu0 0
      %497 = vmatpush2.bf16.xpose.msra.mxu0 %v473
      %498 = vmatprep.subr.bf16.mxu0 0
      %499 = vmatpush2.bf16.xpose.msra.mxu0 %v470
      %500 = vmatprep.subr.bf16.mxu0 0
      %501 = vmatpush2.bf16.xpose.msra.mxu0 %v467
      %502 = vmatprep.subr.bf16.mxu0 0
      %503 = vmatpush2.bf16.xpose.msra.mxu0 %v464
      %504 = vmatprep.subr.bf16.mxu0 0
      %505 = vmatpush2.bf16.xpose.msra.mxu0 %v461
      %506 = vmatprep.subr.bf16.mxu0 0
      %507 = vmatpush2.bf16.xpose.msra.mxu0 %v458
      %508 = vmatprep.subr.bf16.mxu0 0
      %509 = vmatpush2.bf16.xpose.msra.mxu0 %v455
      %510 = vmatprep.mubr.bf16.mxu0 0
      %511 = vmatmul.mubr.bf16.gmra.mxu0 %v425
      %v512 = vpop.f32.mrf.mxu0
      %v513 = vadd.f32 %v396, %v512
      %v514 = vpop.f32.mrf.mxu0
      %v515 = vadd.f32 %v396, %v514
      %v516 = vpop.f32.mrf.mxu0
      %v517 = vadd.f32 %v401, %v516
      %v518 = vpop.f32.mrf.mxu0
      %v519 = vadd.f32 %v401, %v518
      %520 = vmatprep.mubr.bf16.mxu0 0
      %521 = vmatmul.mubr.bf16.gmra.mxu0 %v428
      %v522 = vpop.f32.mrf.mxu0
      %v523 = vadd.f32 %v406, %v522
      %v524 = vpop.f32.mrf.mxu0
      %v525 = vadd.f32 %v406, %v524
      %v526 = vpop.f32.mrf.mxu0
      %v527 = vadd.f32 %v411, %v526
      %v528 = vpop.f32.mrf.mxu0
      %v529 = vadd.f32 %v411, %v528
      %530 = vdwg.mxu0
      %v531 = vmax.f32 %v513, 0.0
      %v532 = vmax.f32 %v515, 0.0
      %v533 = vmax.f32 %v517, 0.0
      %v534 = vmax.f32 %v519, 0.0
      %v535 = vmax.f32 %v523, 0.0
      %v536 = vmax.f32 %v525, 0.0
      %v537 = vmax.f32 %v527, 0.0
      %v538 = vmax.f32 %v529, 0.0
      %v539 = vpack.c.bf16 %v533, %v531
      %v540 = vpack.c.bf16 %v534, %v532
      %v541 = vpack.c.bf16 %v537, %v535
      %v542 = vpack.c.bf16 %v538, %v536
      %v543 = vld [vmem:[%s3] sm:$0xf]
      %v544 = vld [vmem:[%s3 + $0x4] sm:$0xf]
      %v545 = vld [vmem:[%s3 + $0x8] sm:$0xf]
      %v546 = vld [vmem:[%s3 + $0xc] sm:$0xf]
      %v547 = vld [vmem:[%s4] sm:$0xff]
      %v548 = vld [vmem:[%s4 + $0x8] sm:$0xff]
      %v549 = vld [vmem:[%s4 + $0x10] sm:$0xff]
      %v550 = vld [vmem:[%s4 + $0x18] sm:$0xff]
      %552 = vset.pattern.permute.xlu0 0
      %553 = vperm.xlu0 %552, %v547
      %v554 = vpop.permute.xlu0 %553
      %557 = vset.pattern.permute.xlu0 0
      %558 = vperm.xlu0 %557, %v548
      %v559 = vpop.permute.xlu0 %558
      %562 = vset.pattern.permute.xlu0 0
      %563 = vperm.xlu0 %562, %v549
      %v564 = vpop.permute.xlu0 %563
      %567 = vset.pattern.permute.xlu0 0
      %568 = vperm.xlu0 %567, %v550
      %v569 = vpop.permute.xlu0 %568
      %v575 = vunpack.c.l.b16 %v543
      %v576 = vunpack.c.l.b16 %v544
      %v577 = vunpack.c.l.b16 %v545
      %v578 = vunpack.c.l.b16 %v546
      %v579 = vpack.c.b16 %v576, %v575
      %v580 = vpack.c.b16 %v578, %v577
      %vm581 = vcmask 261120
      %v583 = vsel %vm581, %v579, 0
      %v586 = vsel %vm581, %v580, 0
      %588 = vmatprep.subr.bf16.mxu0 0
      %589 = vmatpush1.bf16.msra.mxu0 0
      %590 = vmatprep.subr.bf16.mxu0 0
      %591 = vmatpush1.bf16.msra.mxu0 0
      %592 = vmatprep.subr.bf16.mxu0 0
      %593 = vmatpush1.bf16.msra.mxu0 0
      %594 = vmatprep.subr.bf16.mxu0 0
      %595 = vmatpush1.bf16.msra.mxu0 0
      %596 = vmatprep.subr.bf16.mxu0 0
      %597 = vmatpush1.bf16.msra.mxu0 0
      %598 = vmatprep.subr.bf16.mxu0 0
      %599 = vmatpush1.bf16.msra.mxu0 0
      %600 = vmatprep.subr.bf16.mxu0 %v542
      %601 = vmatpush1.bf16.msra.mxu0 %v541
      %602 = vmatprep.subr.bf16.mxu0 %v540
      %603 = vmatpush1.bf16.msra.mxu0 %v539
      %604 = vmatprep.subr.bf16.mxu0 0
      %605 = vmatpush2.bf16.msra.mxu0 0
      %606 = vmatprep.subr.bf16.mxu0 0
      %607 = vmatpush2.bf16.msra.mxu0 0
      %608 = vmatprep.subr.bf16.mxu0 0
      %609 = vmatpush2.bf16.msra.mxu0 0
      %610 = vmatprep.subr.bf16.mxu0 0
      %611 = vmatpush2.bf16.msra.mxu0 0
      %612 = vmatprep.subr.bf16.mxu0 0
      %613 = vmatpush2.bf16.msra.mxu0 0
      %614 = vmatprep.subr.bf16.mxu0 0
      %615 = vmatpush2.bf16.msra.mxu0 0
      %616 = vmatprep.subr.bf16.mxu0 0
      %617 = vmatpush2.bf16.msra.mxu0 0
      %618 = vmatprep.subr.bf16.mxu0 0
      %619 = vmatpush2.bf16.msra.mxu0 0
      %620 = vmatprep.mubr.bf16.mxu0 0
      %621 = vmatmul.mubr.bf16.gmra.mxu0 %v583
      %v622 = vpop.f32.mrf.mxu0
      %v623 = vadd.f32 %v554, %v622
      %v624 = vpop.f32.mrf.mxu0
      %v625 = vadd.f32 %v554, %v624
      %v626 = vpop.f32.mrf.mxu0
      %v627 = vadd.f32 %v559, %v626
      %v628 = vpop.f32.mrf.mxu0
      %v629 = vadd.f32 %v559, %v628
      %630 = vmatprep.mubr.bf16.mxu0 0
      %631 = vmatmul.mubr.bf16.gmra.mxu0 %v586
      %v632 = vpop.f32.mrf.mxu0
      %v633 = vadd.f32 %v564, %v632
      %v634 = vpop.f32.mrf.mxu0
      %v635 = vadd.f32 %v564, %v634
      %v636 = vpop.f32.mrf.mxu0
      %v637 = vadd.f32 %v569, %v636
      %v638 = vpop.f32.mrf.mxu0
      %v639 = vadd.f32 %v569, %v638
      %640 = vdwg.mxu0
      %v641 = vmax.f32 %v623, 0.0
      %v642 = vmax.f32 %v625, 0.0
      %v643 = vmax.f32 %v627, 0.0
      %v644 = vmax.f32 %v629, 0.0
      %v645 = vmax.f32 %v633, 0.0
      %v646 = vmax.f32 %v635, 0.0
      %v647 = vmax.f32 %v637, 0.0
      %v648 = vmax.f32 %v639, 0.0
      %v649 = vpack.c.bf16 %v643, %v641
      %v650 = vpack.c.bf16 %v644, %v642
      %v651 = vpack.c.bf16 %v647, %v645
      %v652 = vpack.c.bf16 %v648, %v646
      %v653 = vld [vmem:[%s5] sm:$0xf]
      %v654 = vld [vmem:[%s5 + $0x4] sm:$0xf]
      %v655 = vld [vmem:[%s5 + $0x8] sm:$0xf]
      %v656 = vld [vmem:[%s5 + $0xc] sm:$0xf]
      %v657 = vld [vmem:[%s6] sm:$0xff]
      %v658 = vld [vmem:[%s6 + $0x8] sm:$0xff]
      %v659 = vld [vmem:[%s6 + $0x10] sm:$0xff]
      %v660 = vld [vmem:[%s6 + $0x18] sm:$0xff]
      %662 = vset.pattern.permute.xlu0 0
      %663 = vperm.xlu0 %662, %v657
      %v664 = vpop.permute.xlu0 %663
      %667 = vset.pattern.permute.xlu0 0
      %668 = vperm.xlu0 %667, %v658
      %v669 = vpop.permute.xlu0 %668
      %672 = vset.pattern.permute.xlu0 0
      %673 = vperm.xlu0 %672, %v659
      %v674 = vpop.permute.xlu0 %673
      %677 = vset.pattern.permute.xlu0 0
      %678 = vperm.xlu0 %677, %v660
      %v679 = vpop.permute.xlu0 %678
      %v685 = vunpack.c.l.b16 %v653
      %v686 = vunpack.c.l.b16 %v654
      %v687 = vunpack.c.l.b16 %v655
      %v688 = vunpack.c.l.b16 %v656
      %v689 = vpack.c.b16 %v686, %v685
      %v690 = vpack.c.b16 %v688, %v687
      %v692 = vsel %vm581, %v689, 0
      %v695 = vsel %vm581, %v690, 0
      %697 = vmatprep.subr.bf16.mxu0 0
      %698 = vmatpush1.bf16.msra.mxu0 0
      %699 = vmatprep.subr.bf16.mxu0 0
      %700 = vmatpush1.bf16.msra.mxu0 0
      %701 = vmatprep.subr.bf16.mxu0 0
      %702 = vmatpush1.bf16.msra.mxu0 0
      %703 = vmatprep.subr.bf16.mxu0 0
      %704 = vmatpush1.bf16.msra.mxu0 0
      %705 = vmatprep.subr.bf16.mxu0 0
      %706 = vmatpush1.bf16.msra.mxu0 0
      %707 = vmatprep.subr.bf16.mxu0 0
      %708 = vmatpush1.bf16.msra.mxu0 0
      %709 = vmatprep.subr.bf16.mxu0 %v652
      %710 = vmatpush1.bf16.msra.mxu0 %v651
      %711 = vmatprep.subr.bf16.mxu0 %v650
      %712 = vmatpush1.bf16.msra.mxu0 %v649
      %713 = vmatprep.subr.bf16.mxu0 0
      %714 = vmatpush2.bf16.msra.mxu0 0
      %715 = vmatprep.subr.bf16.mxu0 0
      %716 = vmatpush2.bf16.msra.mxu0 0
      %717 = vmatprep.subr.bf16.mxu0 0
      %718 = vmatpush2.bf16.msra.mxu0 0
      %719 = vmatprep.subr.bf16.mxu0 0
      %720 = vmatpush2.bf16.msra.mxu0 0
      %721 = vmatprep.subr.bf16.mxu0 0
      %722 = vmatpush2.bf16.msra.mxu0 0
      %723 = vmatprep.subr.bf16.mxu0 0
      %724 = vmatpush2.bf16.msra.mxu0 0
      %725 = vmatprep.subr.bf16.mxu0 0
      %726 = vmatpush2.bf16.msra.mxu0 0
      %727 = vmatprep.subr.bf16.mxu0 0
      %728 = vmatpush2.bf16.msra.mxu0 0
      %729 = vmatprep.mubr.bf16.mxu0 0
      %730 = vmatmul.mubr.bf16.gmra.mxu0 %v692
      %v731 = vpop.f32.mrf.mxu0
      %v732 = vadd.f32 %v664, %v731
      %v733 = vpop.f32.mrf.mxu0
      %v734 = vadd.f32 %v664, %v733
      %v735 = vpop.f32.mrf.mxu0
      %v736 = vadd.f32 %v669, %v735
      %v737 = vpop.f32.mrf.mxu0
      %v738 = vadd.f32 %v669, %v737
      %739 = vmatprep.mubr.bf16.mxu0 0
      %740 = vmatmul.mubr.bf16.gmra.mxu0 %v695
      %v741 = vpop.f32.mrf.mxu0
      %v742 = vadd.f32 %v674, %v741
      %v743 = vpop.f32.mrf.mxu0
      %v744 = vadd.f32 %v674, %v743
      %v745 = vpop.f32.mrf.mxu0
      %v746 = vadd.f32 %v679, %v745
      %v747 = vpop.f32.mrf.mxu0
      %v748 = vadd.f32 %v679, %v747
      %749 = vdwg.mxu0
      %v750 = vmax.f32 %v732, 0.0
      %v751 = vmax.f32 %v734, 0.0
      %v752 = vmax.f32 %v736, 0.0
      %v753 = vmax.f32 %v738, 0.0
      %v754 = vmax.f32 %v742, 0.0
      %v755 = vmax.f32 %v744, 0.0
      %v756 = vmax.f32 %v746, 0.0
      %v757 = vmax.f32 %v748, 0.0
      %v758 = vpack.c.bf16 %v752, %v750
      %v759 = vpack.c.bf16 %v753, %v751
      %v760 = vpack.c.bf16 %v756, %v754
      %v761 = vpack.c.bf16 %v757, %v755
      %v762 = vld [vmem:[%s7] sm:$0x3]
      %v763 = vld [vmem:[%s8] sm:$0xf]
      %765 = vset.pattern.permute.xlu0 0
      %766 = vperm.xlu0 %765, %v763
      %v767 = vpop.permute.xlu0 %766
      %v770 = vsel %vm581, %v762, 0
      %772 = vmatprep.subr.bf16.mxu0 0
      %773 = vmatpush1.bf16.msra.mxu0 0
      %774 = vmatprep.subr.bf16.mxu0 0
      %775 = vmatpush1.bf16.msra.mxu0 0
      %776 = vmatprep.subr.bf16.mxu0 0
      %777 = vmatpush1.bf16.msra.mxu0 0
      %778 = vmatprep.subr.bf16.mxu0 0
      %779 = vmatpush1.bf16.msra.mxu0 0
      %780 = vmatprep.subr.bf16.mxu0 0
      %781 = vmatpush1.bf16.msra.mxu0 0
      %782 = vmatprep.subr.bf16.mxu0 0
      %783 = vmatpush1.bf16.msra.mxu0 0
      %784 = vmatprep.subr.bf16.mxu0 %v761
      %785 = vmatpush1.bf16.msra.mxu0 %v760
      %786 = vmatprep.subr.bf16.mxu0 %v759
      %787 = vmatpush1.bf16.msra.mxu0 %v758
      %788 = vmatprep.subr.bf16.mxu0 0
      %789 = vmatpush2.bf16.msra.mxu0 0
      %790 = vmatprep.subr.bf16.mxu0 0
      %791 = vmatpush2.bf16.msra.mxu0 0
      %792 = vmatprep.subr.bf16.mxu0 0
      %793 = vmatpush2.bf16.msra.mxu0 0
      %794 = vmatprep.subr.bf16.mxu0 0
      %795 = vmatpush2.bf16.msra.mxu0 0
      %796 = vmatprep.subr.bf16.mxu0 0
      %797 = vmatpush2.bf16.msra.mxu0 0
      %798 = vmatprep.subr.bf16.mxu0 0
      %799 = vmatpush2.bf16.msra.mxu0 0
      %800 = vmatprep.subr.bf16.mxu0 0
      %801 = vmatpush2.bf16.msra.mxu0 0
      %802 = vmatprep.subr.bf16.mxu0 0
      %803 = vmatpush2.bf16.msra.mxu0 0
      %804 = vmatprep.mubr.bf16.mxu0 0
      %805 = vmatmul.mubr.bf16.gmra.mxu0 %v770
      %v806 = vpop.f32.mrf.mxu0
      %v807 = vadd.f32 %v767, %v806
      %v808 = vpop.f32.mrf.mxu0
      %v809 = vadd.f32 %v767, %v808
      %v810 = vpop.f32.mrf.mxu0
      %v811 = vpop.f32.mrf.mxu0
      %812 = vdwg.mxu0
      %v813 = vsub.f32 0.0, %v807
      %v814 = vsub.f32 0.0, %v809
      %v815 = vmul.f32 %v813, 1.442695
      %v816 = vpow.pop %v815
      %v817 = vmul.f32 %v814, 1.442695
      %v818 = vpow.pop %v817
      %v819 = vadd.f32 %v816, 1.0
      %v820 = vadd.f32 %v818, 1.0
      %v821 = vrcp.pop %v819
      %v822 = vrcp.pop %v820
      %823 = vxpose.xlu0.b32.start [1/16] %v821, 128
      %824 = vxpose.xlu0.b32.cont [2/16] 0.0, 128
      %825 = vxpose.xlu0.b32.cont [3/16] 0.0, 128
      %826 = vxpose.xlu0.b32.cont [4/16] 0.0, 128
      %827 = vxpose.xlu0.b32.cont [5/16] 0.0, 128
      %828 = vxpose.xlu0.b32.cont [6/16] 0.0, 128
      %829 = vxpose.xlu0.b32.cont [7/16] 0.0, 128
      %830 = vxpose.xlu0.b32.cont [8/16] 0.0, 128
      %831 = vxpose.xlu0.b32.cont [9/16] 0.0, 128
      %832 = vxpose.xlu0.b32.cont [10/16] 0.0, 128
      %833 = vxpose.xlu0.b32.cont [11/16] 0.0, 128
      %834 = vxpose.xlu0.b32.cont [12/16] 0.0, 128
      %835 = vxpose.xlu0.b32.cont [13/16] 0.0, 128
      %836 = vxpose.xlu0.b32.cont [14/16] 0.0, 128
      %837 = vxpose.xlu0.b32.cont [15/16] 0.0, 128
      %838 = vxpose.xlu0.b32.end [16/16] 0.0, 128
      %v839 = vpop.trf.xlu0
      %v840 = vpop.trf.xlu0
      %v841 = vpop.trf.xlu0
      %v842 = vpop.trf.xlu0
      %v843 = vpop.trf.xlu0
      %v844 = vpop.trf.xlu0
      %v845 = vpop.trf.xlu0
      %v846 = vpop.trf.xlu0
      %v847 = vpop.trf.xlu0
      %v848 = vpop.trf.xlu0
      %v849 = vpop.trf.xlu0
      %v850 = vpop.trf.xlu0
      %v851 = vpop.trf.xlu0
      %v852 = vpop.trf.xlu0
      %v853 = vpop.trf.xlu0
      %v854 = vpop.trf.xlu0
      %855 = vxpose.xlu0.b32.start [1/16] %v822, 128
      %856 = vxpose.xlu0.b32.cont [2/16] 0.0, 128
      %857 = vxpose.xlu0.b32.cont [3/16] 0.0, 128
      %858 = vxpose.xlu0.b32.cont [4/16] 0.0, 128
      %859 = vxpose.xlu0.b32.cont [5/16] 0.0, 128
      %860 = vxpose.xlu0.b32.cont [6/16] 0.0, 128
      %861 = vxpose.xlu0.b32.cont [7/16] 0.0, 128
      %862 = vxpose.xlu0.b32.cont [8/16] 0.0, 128
      %863 = vxpose.xlu0.b32.cont [9/16] 0.0, 128
      %864 = vxpose.xlu0.b32.cont [10/16] 0.0, 128
      %865 = vxpose.xlu0.b32.cont [11/16] 0.0, 128
      %866 = vxpose.xlu0.b32.cont [12/16] 0.0, 128
      %867 = vxpose.xlu0.b32.cont [13/16] 0.0, 128
      %868 = vxpose.xlu0.b32.cont [14/16] 0.0, 128
      %869 = vxpose.xlu0.b32.cont [15/16] 0.0, 128
      %870 = vxpose.xlu0.b32.end [16/16] 0.0, 128
      %v871 = vpop.trf.xlu0
      %v872 = vpop.trf.xlu0
      %v873 = vpop.trf.xlu0
      %v874 = vpop.trf.xlu0
      %v875 = vpop.trf.xlu0
      %v876 = vpop.trf.xlu0
      %v877 = vpop.trf.xlu0
      %v878 = vpop.trf.xlu0
      %v879 = vpop.trf.xlu0
      %v880 = vpop.trf.xlu0
      %v881 = vpop.trf.xlu0
      %v882 = vpop.trf.xlu0
      %v883 = vpop.trf.xlu0
      %v884 = vpop.trf.xlu0
      %v885 = vpop.trf.xlu0
      %v886 = vpop.trf.xlu0
      %887 = vst.msk [vmem:[%s334] sm:$0xff] %vm423, %v839
      %888 = vst.msk [vmem:[%s334 + $0x8] sm:$0xff] %vm423, %v840
      %889 = vst.msk [vmem:[%s334 + $0x10] sm:$0xff] %vm423, %v841
      %890 = vst.msk [vmem:[%s334 + $0x18] sm:$0xff] %vm423, %v842
      %891 = vst.msk [vmem:[%s334 + $0x20] sm:$0xff] %vm423, %v843
      %892 = vst.msk [vmem:[%s334 + $0x28] sm:$0xff] %vm423, %v844
      %893 = vst.msk [vmem:[%s334 + $0x30] sm:$0xff] %vm423, %v845
      %894 = vst.msk [vmem:[%s334 + $0x38] sm:$0xff] %vm423, %v846
      %895 = vst.msk [vmem:[%s334 + $0x40] sm:$0xff] %vm423, %v847
      %896 = vst.msk [vmem:[%s334 + $0x48] sm:$0xff] %vm423, %v848
      %897 = vst.msk [vmem:[%s334 + $0x50] sm:$0xff] %vm423, %v849
      %898 = vst.msk [vmem:[%s334 + $0x58] sm:$0xff] %vm423, %v850
      %899 = vst.msk [vmem:[%s334 + $0x60] sm:$0xff] %vm423, %v851
      %900 = vst.msk [vmem:[%s334 + $0x68] sm:$0xff] %vm423, %v852
      %901 = vst.msk [vmem:[%s334 + $0x70] sm:$0xff] %vm423, %v853
      %902 = vst.msk [vmem:[%s334 + $0x78] sm:$0xff] %vm423, %v854
      %903 = vst.msk [vmem:[%s334 + $0x80] sm:$0xff] %vm423, %v871
      %904 = vst.msk [vmem:[%s334 + $0x88] sm:$0xff] %vm423, %v872
      %905 = vst.msk [vmem:[%s334 + $0x90] sm:$0xff] %vm423, %v873
      %906 = vst.msk [vmem:[%s334 + $0x98] sm:$0xff] %vm423, %v874
      %907 = vst.msk [vmem:[%s334 + $0xa0] sm:$0xff] %vm423, %v875
      %908 = vst.msk [vmem:[%s334 + $0xa8] sm:$0xff] %vm423, %v876
      %909 = vst.msk [vmem:[%s334 + $0xb0] sm:$0xff] %vm423, %v877
      %910 = vst.msk [vmem:[%s334 + $0xb8] sm:$0xff] %vm423, %v878
      %911 = vst.msk [vmem:[%s334 + $0xc0] sm:$0xff] %vm423, %v879
      %912 = vst.msk [vmem:[%s334 + $0xc8] sm:$0xff] %vm423, %v880
      %913 = vst.msk [vmem:[%s334 + $0xd0] sm:$0xff] %vm423, %v881
      %914 = vst.msk [vmem:[%s334 + $0xd8] sm:$0xff] %vm423, %v882
      %915 = vst.msk [vmem:[%s334 + $0xe0] sm:$0xff] %vm423, %v883
      %916 = vst.msk [vmem:[%s334 + $0xe8] sm:$0xff] %vm423, %v884
      %917 = vst.msk [vmem:[%s334 + $0xf0] sm:$0xff] %vm423, %v885
      %918 = vst.msk [vmem:[%s334 + $0xf8] sm:$0xff] %vm423, %v886
      %s919 = smul.u32 32, %s20
      %p920 = scmp.lt.s32.totalorder %s919, 127
      %s921 = scalar_select %p920, %s919, 127
      %s922 = smul.addr %s921, 8
      %s923 = scalar_lea.vmem %s9, %s922
      // Predicated region
      $region57: #{tpu_custom_call.1} parent=55 // pred_check
        %p924 = pneg %p232
      $region58: #{tpu_custom_call.1} parent=55 // pred_check_branch
        %926 = sbr.rel (%p924) target = $region60
      $region59: #{tpu_custom_call.1} parent=55 // pred_region
        %s927 = smul.u32 32, %s20
      $region60: #{tpu_custom_call.1} parent=55 // pred_fallthru
        _
    $region56: #{tpu_custom_call.1} parent=5 // pred_fallthru
      _
    %p928 = scmp.le.s32.totalorder 2, %s15
    // Predicated region
    $region61: #{tpu_custom_call.1} parent=5 // pred_check
      %p929 = pneg %p928
    $region62: #{tpu_custom_call.1} parent=5 // pred_check_branch
      %931 = sbr.rel (%p929) target = $region64
    $region63: #{tpu_custom_call.1} parent=5 // pred_region
      %s932 = ssub.s32 %s15, 2
      // Predicated region
      $region65: #{tpu_custom_call.1} parent=63 // pred_check
        %p933 = pneg %p238
      $region66: #{tpu_custom_call.1} parent=63 // pred_check_branch
        %935 = sbr.rel (%p933) target = $region68
      $region67: #{tpu_custom_call.1} parent=63 // pred_region
        %s936 = smul.u32 32, %s21
        %p937 = scmp.lt.s32.totalorder %s936, 127
        %s938 = scalar_select %p937, %s936, 127
        %s939 = smul.addr %s938, 8
        %s940 = scalar_lea.vmem %s9, %s939
      $region68: #{tpu_custom_call.1} parent=63 // pred_fallthru
        _
    $region64: #{tpu_custom_call.1} parent=5 // pred_fallthru
      _
  $region6: #{tpu_custom_call.1} parent=0 // loop_footer
    %s19 = sadd.s32 1, %s15
  $region7: #{tpu_custom_call.1} parent=0 // loop_footer_branch
    %14 = sbr.rel target = $region3
  $region8: #{tpu_custom_call.1} parent=0 // loop_exit
    _

</llo_original>
